<compile_context>
chip_gen: v5e
topology: v5e:2x2
jax: 0.10.0
libtpu: 0.0.40
codegen_flags: <defaults>
</compile_context>

<pallas_src>
import functools

import jax
import jax.numpy as jnp
from jax.experimental import pallas as pl
from jax.experimental.pallas import tpu as pltpu


def _supcon_kernel(lab_col_ref, lab_row_ref, fq_ref, fk_ref, out_ref,
                   tot_acc, pos_acc, *, inv_temp, tile_q, tile_k):
    i = pl.program_id(0)   # row tile (parallel)
    j = pl.program_id(1)   # column / reduction tile (arbitrary, innermost)

    @pl.when(j == 0)
    def _():
        tot_acc[...] = jnp.zeros_like(tot_acc)
        pos_acc[...] = jnp.zeros_like(pos_acc)

    # Operands are pre-normalized in the wrapper and 1/T is folded into fq, so
    # the MXU result is already the scaled logits tile.  NT contraction -> no
    # fk transpose/relayout.
    sim = jax.lax.dot_general(
        fq_ref[...], fk_ref[...],
        dimension_numbers=(((1,), (1,)), ((), ())),
        preferred_element_type=jnp.float32)            # (Tq, Tk) f32

    # Stable exp: rows are L2-normalized so sim <= inv_temp; the constant shift
    # cancels exactly in log(pos_sum) - log(tot_sum).
    e = jnp.exp(sim - jnp.float32(inv_temp))

    # Positive mask: same label.  (Self pairs are removed below only on tiles
    # that touch the diagonal.)
    pos = lab_col_ref[...] == lab_row_ref[...]         # (Tq, Tk) bool

    # Does this tile intersect the diagonal?  Off-diagonal tiles (the common
    # case for large grids) skip the iotas / eq / extra selects entirely.
    diag_hit = jnp.logical_and(i * tile_q < (j + 1) * tile_k,
                               j * tile_k < (i + 1) * tile_q)

    @pl.when(diag_hit)
    def _():
        row = i * tile_q + jax.lax.broadcasted_iota(jnp.int32, sim.shape, 0)
        col = j * tile_k + jax.lax.broadcasted_iota(jnp.int32, sim.shape, 1)
        # Zero the self-similarity (== masked_fill(-inf) before exp); since the
        # zeroed value also feeds the positive select, "& ~eye" is implicit.
        e_nd = jnp.where(row == col, jnp.float32(0.0), e)
        tot_acc[...] += e_nd
        pos_acc[...] += jnp.where(pos, e_nd, jnp.float32(0.0))

    @pl.when(jnp.logical_not(diag_hit))
    def _():
        tot_acc[...] += e
        pos_acc[...] += jnp.where(pos, e, jnp.float32(0.0))

    @pl.when(j == pl.num_programs(1) - 1)
    def _():
        # Single cross-lane reduce per row tile (XLU), then the logs.
        tot = jnp.sum(tot_acc[...], axis=1, keepdims=True)
        psum = jnp.sum(pos_acc[...], axis=1, keepdims=True)
        # mean_log_prob == log_prob (log_prob is constant along the row, so the
        # masked mean over positives collapses to log_prob itself).  Rows with
        # zero positives give log(0) = -inf, matching the PyTorch module where
        # the diagonal-fallback positive has logit -inf.
        out_ref[...] = jnp.log(psum) - jnp.log(tot)


_ROW_TILES = (512, 256, 128, 64, 32, 16, 8)
_COL_TILES = (1024, 512, 256, 128)


def _pick_row_tile(B):
    # Sublane axis: multiple of 8 (or the full array).  Prefer >= 2 row tiles
    # so the "parallel" axis can be split across v7x's two TensorCores.
    for t in _ROW_TILES:
        if B % t == 0 and B // t >= 2:
            return t
    for t in _ROW_TILES:
        if B % t == 0:
            return t
    return B


def _pick_col_tile(B):
    # Lane axis (labels-row block / logits columns): multiple of 128 (or full).
    for t in _COL_TILES:
        if B % t == 0:
            return t
    return B


def _footprint_bytes(tq, tk, D, op_bytes):
    # double-buffered operand blocks + f32 accumulators + headroom for the
    # (Tq, Tk) sim/exp/mask intermediates.
    return 2 * (tq + tk) * D * op_bytes + 2 * tq * tk * 4 + 4 * tq * tk * 4


def _fit_tiles(B, D, op_bytes, budget=40 * 1024 * 1024):
    """Shrink tiles until the VMEM footprint fits the v7x (64 MiB) budget."""
    tq, tk = _pick_row_tile(B), _pick_col_tile(B)
    while (_footprint_bytes(tq, tk, D, op_bytes) > budget
           and tk >= 256 and (tk // 2) % 128 == 0):
        tk //= 2
    while (_footprint_bytes(tq, tk, D, op_bytes) > budget
           and tq >= 16 and (tq // 2) % 8 == 0):
        tq //= 2
    return tq, tk


def supcon_loss(features, labels=None, temperature=0.07,
                matmul_dtype=jnp.bfloat16):
    """Pallas implementation of SupConLoss.forward(features, labels)."""
    # TODO(synk): the optional user-provided `mask` argument of the PyTorch
    # module is not supported; only the labels-based positive mask is.
    B, D = features.shape
    if labels is None:
        labels = jnp.arange(B, dtype=jnp.int32)
    inv_temp = float(1.0 / temperature)

    # Normalize once (F.normalize(dim=1, eps=1e-12)) and fold 1/T into the row
    # operand; the kernel then only does matmul + exp + accumulate.
    f32 = features.astype(jnp.float32)
    ss = jnp.sum(f32 * f32, axis=1, keepdims=True)
    fn = f32 * jax.lax.rsqrt(jnp.maximum(ss, jnp.float32(1e-24)))
    fq = (fn * jnp.float32(inv_temp)).astype(matmul_dtype)   # row operand
    fk = fn.astype(matmul_dtype)                              # key operand

    op_bytes = jnp.dtype(matmul_dtype).itemsize
    tile_q, tile_k = _fit_tiles(B, D, op_bytes)
    grid = (B // tile_q, B // tile_k)

    fp = _footprint_bytes(tile_q, tile_k, D, op_bytes)
    vmem_limit = int(min(48 * 1024 * 1024, max(32 * 1024 * 1024, fp + (12 << 20))))

    lab_col = labels.reshape(B, 1).astype(jnp.int32)
    lab_row = labels.reshape(1, B).astype(jnp.int32)

    kernel = functools.partial(
        _supcon_kernel, inv_temp=inv_temp, tile_q=tile_q, tile_k=tile_k)

    log_prob = pl.pallas_call(
        kernel,
        out_shape=jax.ShapeDtypeStruct((B, 1), jnp.float32),
        grid_spec=pltpu.PrefetchScalarGridSpec(
            num_scalar_prefetch=0,
            grid=grid,
            in_specs=[
                pl.BlockSpec((tile_q, 1), lambda i, j: (i, 0)),   # labels column
                pl.BlockSpec((1, tile_k), lambda i, j: (0, j)),   # labels row
                pl.BlockSpec((tile_q, D), lambda i, j: (i, 0)),   # query rows (1/T folded)
                pl.BlockSpec((tile_k, D), lambda i, j: (j, 0)),   # key rows
            ],
            out_specs=pl.BlockSpec((tile_q, 1), lambda i, j: (i, 0)),
            scratch_shapes=[
                pltpu.VMEM((tile_q, tile_k), jnp.float32),  # lane-wide total-exp acc
                pltpu.VMEM((tile_q, tile_k), jnp.float32),  # lane-wide positive-exp acc
            ],
        ),
        compiler_params=pltpu.CompilerParams(
            dimension_semantics=("parallel", "arbitrary"),
            vmem_limit_bytes=vmem_limit,
        ),
    )(lab_col, lab_row, fq, fk)

    return -jnp.mean(log_prob[:, 0])


def _supcon_loss_ref(features, labels, temperature=0.07):
    """Pure-JAX reference mirroring the PyTorch module."""
    B = features.shape[0]
    f = features / jnp.maximum(
        jnp.linalg.norm(features, axis=1, keepdims=True), 1e-12)
    sim = jnp.matmul(f, f.T, precision=jax.lax.Precision.HIGHEST) / temperature
    eye = jnp.eye(B, dtype=bool)
    sim = jnp.where(eye, -jnp.inf, sim)
    pos = (labels[:, None] == labels[None, :]) & (~eye)
    zero_pos = pos.sum(1) == 0
    pos = jnp.where(zero_pos[:, None] & eye, True, pos)
    exp_logits = jnp.exp(sim)
    pos_exp_sum = jnp.sum(exp_logits * pos, axis=1, keepdims=True)
    log_prob = jnp.log(pos_exp_sum) - jnp.log(exp_logits.sum(1, keepdims=True))
    mean_log_prob = (pos * log_prob).sum(1) / pos.sum(1)
    return -mean_log_prob.mean()


if __name__ == "__main__":
    key = jax.random.PRNGKey(0)

    # --- Small shape (module input is [batch_size, feature_dim]) ---
    B, D = 8, 32
    k_feat, k_rest = jax.random.split(key)
    features = jax.random.normal(k_feat, (B, D), dtype=jnp.float32)
    labels = jnp.array([0, 0, 1, 1, 2, 2, 3, 3], dtype=jnp.int32)
    ref = _supcon_loss_ref(features, labels, temperature=0.07)

    # Exact (f32 matmul) path.
    loss_f32 = supcon_loss(features, labels, temperature=0.07,
                           matmul_dtype=jnp.float32)
    jax.block_until_ready(loss_f32)
    assert jnp.allclose(loss_f32, ref, rtol=1e-5, atol=1e-5), (loss_f32, ref)

    # Default bf16 MXU path (looser tolerance per the perf review).
    loss_bf16 = supcon_loss(features, labels, temperature=0.07)
    jax.block_until_ready(loss_bf16)
    assert jnp.allclose(loss_bf16, ref, rtol=5e-2, atol=5e-2), (loss_bf16, ref)

    # --- Multi-tile shape: exercises diagonal-gated and off-diagonal branches ---
    B2, D2 = 384, 64
    k_feat2, k_lab2 = jax.random.split(k_rest)
    features2 = jax.random.normal(k_feat2, (B2, D2), dtype=jnp.float32)
    labels2 = jax.random.randint(k_lab2, (B2,), 0, 8, dtype=jnp.int32)
    ref2 = _supcon_loss_ref(features2, labels2, temperature=0.07)

    loss2_f32 = supcon_loss(features2, labels2, temperature=0.07,
                            matmul_dtype=jnp.float32)
    jax.block_until_ready(loss2_f32)
    assert jnp.allclose(loss2_f32, ref2, rtol=1e-3, atol=1e-3), (loss2_f32, ref2)

    loss2_bf16 = supcon_loss(features2, labels2, temperature=0.07)
    jax.block_until_ready(loss2_bf16)
    assert jnp.allclose(loss2_bf16, ref2, rtol=5e-2, atol=5e-2), (loss2_bf16, ref2)

    print("KERNEL_OK")
</pallas_src>

<mosaic_0001>
module attributes {stable_mosaic.version = 11 : i64} {
  func.func @_supcon_kernel(%arg0: i32, %arg1: i32, %arg2: memref<8x1xi32, #tpu.memory_space<vmem>>, %arg3: memref<1x8xi32, #tpu.memory_space<vmem>>, %arg4: memref<8x32xf32, #tpu.memory_space<vmem>>, %arg5: memref<8x32xf32, #tpu.memory_space<vmem>>, %arg6: memref<8x1xf32, #tpu.memory_space<vmem>>, %arg7: memref<8x8xf32, #tpu.memory_space<vmem>>, %arg8: memref<8x8xf32, #tpu.memory_space<vmem>>) attributes {dimension_semantics = [#tpu.dimension_semantics<parallel>, #tpu.dimension_semantics<arbitrary>], iteration_bounds = array<i64: 1, 1>, scalar_prefetch = 0 : i64, scratch_operands = 2 : i64, tpu.core_type = #tpu.core_type<tc>, window_params = [{transform_indices = @transform_0, window_bounds = array<i64: 8, 1>}, {transform_indices = @transform_1, window_bounds = array<i64: 1, 8>}, {transform_indices = @transform_2, window_bounds = array<i64: 8, 32>}, {transform_indices = @transform_3, window_bounds = array<i64: 8, 32>}, {transform_indices = @transform_4, window_bounds = array<i64: 8, 1>}]} {
    %c0_i32 = arith.constant 0 : i32
    %0 = arith.cmpi eq, %arg1, %c0_i32 : i32
    %1 = arith.extui %0 : i1 to i32
    %c0_i32_0 = arith.constant 0 : i32
    %2 = arith.cmpi ne, %1, %c0_i32_0 : i32
    scf.if %2 {
      %cst_17 = arith.constant 0.000000e+00 : f32
      %31 = vector.broadcast %cst_17 : f32 to vector<8x8xf32>
      %c0_18 = arith.constant 0 : index
      %c0_19 = arith.constant 0 : index
      %32 = vector.load %arg7[%c0_18, %c0_19] : memref<8x8xf32, #tpu.memory_space<vmem>>, vector<8x8xf32>
      tpu.vector_store %arg7[%c0_18, %c0_19], %31 {strides = array<i32>} : memref<8x8xf32, #tpu.memory_space<vmem>>, vector<8x8xf32>,
      %cst_20 = arith.constant 0.000000e+00 : f32
      %33 = vector.broadcast %cst_20 : f32 to vector<8x8xf32>
      %c0_21 = arith.constant 0 : index
      %c0_22 = arith.constant 0 : index
      %34 = vector.load %arg8[%c0_21, %c0_22] : memref<8x8xf32, #tpu.memory_space<vmem>>, vector<8x8xf32>
      tpu.vector_store %arg8[%c0_21, %c0_22], %33 {strides = array<i32>} : memref<8x8xf32, #tpu.memory_space<vmem>>, vector<8x8xf32>,
    } else {
    }
    %c0 = arith.constant 0 : index
    %c0_1 = arith.constant 0 : index
    %3 = vector.load %arg4[%c0, %c0_1] : memref<8x32xf32, #tpu.memory_space<vmem>>, vector<8x32xf32>
    %c0_2 = arith.constant 0 : index
    %c0_3 = arith.constant 0 : index
    %4 = vector.load %arg5[%c0_2, %c0_3] : memref<8x32xf32, #tpu.memory_space<vmem>>, vector<8x32xf32>
    %cst = arith.constant dense<0.000000e+00> : vector<8x8xf32>
    %5 = tpu.matmul %3, %4, %cst {dimension_numbers = #tpu.dot_dimension_numbers<[1], [1], [0], [0], [0, 0, 1, 0], [], []>} : vector<8x32xf32>, vector<8x32xf32>, vector<8x8xf32> -> vector<8x8xf32>
    %cst_4 = arith.constant 14.2857141 : f32
    %6 = vector.broadcast %cst_4 : f32 to vector<8x8xf32>
    %7 = arith.subf %5, %6 : vector<8x8xf32>
    %8 = math.exp %7 : vector<8x8xf32>
    %c0_5 = arith.constant 0 : index
    %c0_6 = arith.constant 0 : index
    %9 = vector.load %arg2[%c0_5, %c0_6] : memref<8x1xi32, #tpu.memory_space<vmem>>, vector<8x1xi32>
    %c0_7 = arith.constant 0 : index
    %c0_8 = arith.constant 0 : index
    %10 = vector.load %arg3[%c0_7, %c0_8] : memref<1x8xi32, #tpu.memory_space<vmem>>, vector<1x8xi32>
    %11 = vector.broadcast %9 : vector<8x1xi32> to vector<8x8xi32>
    %12 = vector.broadcast %10 : vector<1x8xi32> to vector<8x8xi32>
    %13 = arith.cmpi eq, %11, %12 : vector<8x8xi32>
    %c8_i32 = arith.constant 8 : i32
    %14 = arith.muli %arg0, %c8_i32 : i32
    %c1_i32 = arith.constant 1 : i32
    %15 = arith.addi %arg1, %c1_i32 : i32
    %c8_i32_9 = arith.constant 8 : i32
    %16 = arith.muli %15, %c8_i32_9 : i32
    %17 = arith.cmpi slt, %14, %16 : i32
    %c8_i32_10 = arith.constant 8 : i32
    %18 = arith.muli %arg1, %c8_i32_10 : i32
    %c1_i32_11 = arith.constant 1 : i32
    %19 = arith.addi %arg0, %c1_i32_11 : i32
    %c8_i32_12 = arith.constant 8 : i32
    %20 = arith.muli %19, %c8_i32_12 : i32
    %21 = arith.cmpi slt, %18, %20 : i32
    %22 = arith.andi %17, %21 : i1
    %23 = arith.extui %22 : i1 to i32
    %c0_i32_13 = arith.constant 0 : i32
    %24 = arith.cmpi ne, %23, %c0_i32_13 : i32
    scf.if %24 {
      %c8_i32_17 = arith.constant 8 : i32
      %31 = arith.muli %arg0, %c8_i32_17 : i32
      %32 = tpu.iota {dimensions = array<i32: 0>} : vector<8x8xi32>
      %33 = vector.broadcast %31 : i32 to vector<8x8xi32>
      %34 = arith.addi %33, %32 : vector<8x8xi32>
      %c8_i32_18 = arith.constant 8 : i32
      %35 = arith.muli %arg1, %c8_i32_18 : i32
      %36 = tpu.iota {dimensions = array<i32: 1>} : vector<8x8xi32>
      %37 = vector.broadcast %35 : i32 to vector<8x8xi32>
      %38 = arith.addi %37, %36 : vector<8x8xi32>
      %39 = arith.cmpi eq, %34, %38 : vector<8x8xi32>
      %cst_19 = arith.constant 0.000000e+00 : f32
      %40 = vector.broadcast %cst_19 : f32 to vector<8x8xf32>
      %41 = arith.select %39, %40, %8 : vector<8x8xi1>, vector<8x8xf32>
      %c0_20 = arith.constant 0 : index
      %c0_21 = arith.constant 0 : index
      %42 = vector.load %arg7[%c0_20, %c0_21] : memref<8x8xf32, #tpu.memory_space<vmem>>, vector<8x8xf32>
      %43 = arith.addf %42, %41 : vector<8x8xf32>
      %c0_22 = arith.constant 0 : index
      %c0_23 = arith.constant 0 : index
      %44 = vector.load %arg7[%c0_22, %c0_23] : memref<8x8xf32, #tpu.memory_space<vmem>>, vector<8x8xf32>
      tpu.vector_store %arg7[%c0_22, %c0_23], %43 {strides = array<i32>} : memref<8x8xf32, #tpu.memory_space<vmem>>, vector<8x8xf32>,
      %c0_24 = arith.constant 0 : index
      %c0_25 = arith.constant 0 : index
      %45 = vector.load %arg8[%c0_24, %c0_25] : memref<8x8xf32, #tpu.memory_space<vmem>>, vector<8x8xf32>
      %cst_26 = arith.constant 0.000000e+00 : f32
      %46 = vector.broadcast %cst_26 : f32 to vector<8x8xf32>
      %47 = arith.select %13, %41, %46 : vector<8x8xi1>, vector<8x8xf32>
      %48 = arith.addf %45, %47 : vector<8x8xf32>
      %c0_27 = arith.constant 0 : index
      %c0_28 = arith.constant 0 : index
      %49 = vector.load %arg8[%c0_27, %c0_28] : memref<8x8xf32, #tpu.memory_space<vmem>>, vector<8x8xf32>
      tpu.vector_store %arg8[%c0_27, %c0_28], %48 {strides = array<i32>} : memref<8x8xf32, #tpu.memory_space<vmem>>, vector<8x8xf32>,
    } else {
    }
    %true = arith.constant true
    %25 = arith.xori %22, %true : i1
    %26 = arith.extui %25 : i1 to i32
    %c0_i32_14 = arith.constant 0 : i32
    %27 = arith.cmpi ne, %26, %c0_i32_14 : i32
    scf.if %27 {
      %c0_17 = arith.constant 0 : index
      %c0_18 = arith.constant 0 : index
      %31 = vector.load %arg7[%c0_17, %c0_18] : memref<8x8xf32, #tpu.memory_space<vmem>>, vector<8x8xf32>
      %32 = arith.addf %31, %8 : vector<8x8xf32>
      %c0_19 = arith.constant 0 : index
      %c0_20 = arith.constant 0 : index
      %33 = vector.load %arg7[%c0_19, %c0_20] : memref<8x8xf32, #tpu.memory_space<vmem>>, vector<8x8xf32>
      tpu.vector_store %arg7[%c0_19, %c0_20], %32 {strides = array<i32>} : memref<8x8xf32, #tpu.memory_space<vmem>>, vector<8x8xf32>,
      %c0_21 = arith.constant 0 : index
      %c0_22 = arith.constant 0 : index
      %34 = vector.load %arg8[%c0_21, %c0_22] : memref<8x8xf32, #tpu.memory_space<vmem>>, vector<8x8xf32>
      %cst_23 = arith.constant 0.000000e+00 : f32
      %35 = vector.broadcast %cst_23 : f32 to vector<8x8xf32>
      %36 = arith.select %13, %8, %35 : vector<8x8xi1>, vector<8x8xf32>
      %37 = arith.addf %34, %36 : vector<8x8xf32>
      %c0_24 = arith.constant 0 : index
      %c0_25 = arith.constant 0 : index
      %38 = vector.load %arg8[%c0_24, %c0_25] : memref<8x8xf32, #tpu.memory_space<vmem>>, vector<8x8xf32>
      tpu.vector_store %arg8[%c0_24, %c0_25], %37 {strides = array<i32>} : memref<8x8xf32, #tpu.memory_space<vmem>>, vector<8x8xf32>,
    } else {
    }
    %c0_i32_15 = arith.constant 0 : i32
    %28 = arith.cmpi eq, %arg1, %c0_i32_15 : i32
    %29 = arith.extui %28 : i1 to i32
    %c0_i32_16 = arith.constant 0 : i32
    %30 = arith.cmpi ne, %29, %c0_i32_16 : i32
    scf.if %30 {
      %c0_17 = arith.constant 0 : index
      %c0_18 = arith.constant 0 : index
      %31 = vector.load %arg7[%c0_17, %c0_18] : memref<8x8xf32, #tpu.memory_space<vmem>>, vector<8x8xf32>
      %cst_19 = arith.constant dense<0.000000e+00> : vector<8xf32>
      %32 = vector.multi_reduction <add>, %31, %cst_19 [1] : vector<8x8xf32> to vector<8xf32>
      %33 = vector.shape_cast %32 : vector<8xf32> to vector<8x1xf32>
      %c0_20 = arith.constant 0 : index
      %c0_21 = arith.constant 0 : index
      %34 = vector.load %arg8[%c0_20, %c0_21] : memref<8x8xf32, #tpu.memory_space<vmem>>, vector<8x8xf32>
      %cst_22 = arith.constant dense<0.000000e+00> : vector<8xf32>
      %35 = vector.multi_reduction <add>, %34, %cst_22 [1] : vector<8x8xf32> to vector<8xf32>
      %36 = vector.shape_cast %35 : vector<8xf32> to vector<8x1xf32>
      %37 = math.log %36 : vector<8x1xf32>
      %38 = math.log %33 : vector<8x1xf32>
      %39 = arith.subf %37, %38 : vector<8x1xf32>
      %c0_23 = arith.constant 0 : index
      %c0_24 = arith.constant 0 : index
      %40 = vector.load %arg6[%c0_23, %c0_24] : memref<8x1xf32, #tpu.memory_space<vmem>>, vector<8x1xf32>
      tpu.vector_store %arg6[%c0_23, %c0_24], %39 {strides = array<i32>} : memref<8x1xf32, #tpu.memory_space<vmem>>, vector<8x1xf32>,
    } else {
    }
    return
  }
  func.func @transform_0(%arg0: i32, %arg1: i32) -> (i32, i32) {
    %c0_i32 = arith.constant 0 : i32
    %c0_i32_0 = arith.constant 0 : i32
    return %arg0, %c0_i32 : i32, i32
  }
  func.func @transform_1(%arg0: i32, %arg1: i32) -> (i32, i32) {
    %c0_i32 = arith.constant 0 : i32
    %c0_i32_0 = arith.constant 0 : i32
    return %c0_i32, %arg1 : i32, i32
  }
  func.func @transform_2(%arg0: i32, %arg1: i32) -> (i32, i32) {
    %c0_i32 = arith.constant 0 : i32
    %c0_i32_0 = arith.constant 0 : i32
    return %arg0, %c0_i32 : i32, i32
  }
  func.func @transform_3(%arg0: i32, %arg1: i32) -> (i32, i32) {
    %c0_i32 = arith.constant 0 : i32
    %c0_i32_0 = arith.constant 0 : i32
    return %arg1, %c0_i32 : i32, i32
  }
  func.func @transform_4(%arg0: i32, %arg1: i32) -> (i32, i32) {
    %c0_i32 = arith.constant 0 : i32
    %c0_i32_0 = arith.constant 0 : i32
    return %arg0, %c0_i32 : i32, i32
  }
}

</mosaic_0001>

<llo_original>
// kernel: tpu_custom_call.1
$region0: #{tpu_custom_call.1}
  #allocation0 [shape = 'u32[]', space=smem, size = 0x4, offset = 0x4, fixed_abs, tag = 'smem constant byte address 0x4 - core index']
  #allocation1 [shape = 'u32[72,128]{1,0:T(1,128)}', space=vmem, size = 0x9000, scoped, tag = 'internal scratch']
  #allocation2 [shape = 'f32[8,8]{1,0:T(8,128)}', space=vmem, size = 0x1000, scoped, tag = 'scratch operand']
  #allocation3 [shape = 'f32[8,8]{1,0:T(8,128)}', space=vmem, size = 0x1000, scoped, tag = 'scratch operand']
  %s0 = inlined_call_operand.vmem [shape: s32[8,1], index: 0, kind: input, shape index: {}]
  %s1 = inlined_call_operand.vmem [shape: s32[1,8], index: 1, kind: input, shape index: {}]
  %s2 = inlined_call_operand.vmem [shape: f32[8,32], index: 2, kind: input, shape index: {}]
  %s3 = inlined_call_operand.hbm [shape: f32[8,32], index: 3, kind: input, shape index: {}]
  %s4 = inlined_call_operand.vmem [shape: f32[8,1], index: 4, kind: output, shape index: {}]
  %s5 = sld [smem:[#allocation0]]
  $region46: #{tpu_custom_call.1} parent=0
    _
  %s7 = ssub.s32 1, %s5
  %s8 = scalar_select 0, %s7, %s5
  $region1: #{tpu_custom_call.1} parent=0
    #allocation4 [shape = 'u8[4096]{0}', space=vmem, size = 0x1000, scoped, tag = 'input window, operand 3, single buffered']
    #allocation5 [shape = 's32[1]{0}', space=sflag, size = 0x4, scoped, tag = 'scoped memory for tpu_custom_call.1']
    %9 = vsyncpa [#allocation5], 0
    // Predicated region
    $region2: #{tpu_custom_call.1} parent=1 // pred_check
      _
    $region3: #{tpu_custom_call.1} parent=1 // pred_check_branch
      %11 = sbr.rel (0) target = $region5
    $region4: #{tpu_custom_call.1} parent=1 // pred_region
      _
    $region5: #{tpu_custom_call.1} parent=1 // pred_fallthru
      _
    // Predicated region
    $region6: #{tpu_custom_call.1} parent=1 // pred_check
      _
    $region7: #{tpu_custom_call.1} parent=1 // pred_check_branch
      %13 = sbr.rel (0) target = $region9
    $region8: #{tpu_custom_call.1} parent=1 // pred_region
      _
    $region9: #{tpu_custom_call.1} parent=1 // pred_fallthru
      _
    // Predicated region
    $region10: #{tpu_custom_call.1} parent=1 // pred_check
      _
    $region11: #{tpu_custom_call.1} parent=1 // pred_check_branch
      %15 = sbr.rel (0) target = $region13
    $region12: #{tpu_custom_call.1} parent=1 // pred_region
      _
    $region13: #{tpu_custom_call.1} parent=1 // pred_fallthru
      _
    // Predicated region
    $region14: #{tpu_custom_call.1} parent=1 // pred_check
      _
    $region15: #{tpu_custom_call.1} parent=1 // pred_check_branch
      %17 = sbr.rel (0) target = $region17
    $region16: #{tpu_custom_call.1} parent=1 // pred_region
      %19 = vsyncadd [#allocation5], 0
      %s21 = sshll.u32 %s3, 4
      %s22 = int_to_ptr.hbm [resolvable:$true] %s21
      %s23 = sshll.u32 [#allocation4], 4
      %s24 = int_to_ptr.vmem [resolvable:$true] %s23
      %26 = dma.hbm_to_vmem [thread:$0]  %s22, 128, %s24, [#allocation5]
    $region17: #{tpu_custom_call.1} parent=1 // pred_fallthru
      _
    // Predicated region
    $region18: #{tpu_custom_call.1} parent=1 // pred_check
      _
    $region19: #{tpu_custom_call.1} parent=1 // pred_check_branch
      %28 = sbr.rel (0) target = $region21
    $region20: #{tpu_custom_call.1} parent=1 // pred_region
      %30 = dma.done [#allocation5], 128
    $region21: #{tpu_custom_call.1} parent=1 // pred_fallthru
      _
    %p31 = scmp.eq.s32.totalorder 0, 0
    // Predicated region
    $region22: #{tpu_custom_call.1} parent=1 // pred_check
      %p32 = pneg %p31
    $region23: #{tpu_custom_call.1} parent=1 // pred_check_branch
      %34 = sbr.rel (%p32) target = $region25
    $region24: #{tpu_custom_call.1} parent=1 // pred_region
      %vm35 = vcmask 64512
      %36 = vst.msk [vmem:[#allocation2] sm:$0xff] %vm35, 0.0
      %37 = vst.msk [vmem:[#allocation3] sm:$0xff] %vm35, 0.0
    $region25: #{tpu_custom_call.1} parent=1 // pred_fallthru
      _
    %v38 = vld [vmem:[%s2] sm:$0xff]
    %v39 = vld [vmem:[#allocation4] sm:$0xff]
    %vm40 = vcmask 261120
    %v42 = vsel %vm40, %v38, 0
    %v45 = vsel %vm40, %v39, 0
    %47 = vmatpush.xpose.msra.mxu0 0.0
    %48 = vmatpush.xpose.msra.mxu0 0.0
    %49 = vmatpush.xpose.msra.mxu0 0.0
    %50 = vmatpush.xpose.msra.mxu0 0.0
    %51 = vmatpush.xpose.msra.mxu0 0.0
    %52 = vmatpush.xpose.msra.mxu0 0.0
    %53 = vmatpush.xpose.msra.mxu0 0.0
    %54 = vmatpush.xpose.msra.mxu0 0.0
    %55 = vmatpush.xpose.msra.mxu0 0.0
    %56 = vmatpush.xpose.msra.mxu0 0.0
    %57 = vmatpush.xpose.msra.mxu0 0.0
    %58 = vmatpush.xpose.msra.mxu0 0.0
    %59 = vmatpush.xpose.msra.mxu0 0.0
    %60 = vmatpush.xpose.msra.mxu0 0.0
    %61 = vmatpush.xpose.msra.mxu0 0.0
    %62 = vmatpush.xpose.msra.mxu0 %v45
    %63 = vmatmul.f32.gmra.mxu0 %v42
    %v64 = vpop.f32.mrf.mxu0
    %v65 = vadd.f32 0.0, %v64
    %66 = vdwg.mxu0
    %v67 = vsub.f32 %v65, 14.285714
    %v68 = vmul.f32 %v67, 1.442695
    %v69 = vpow.pop %v68
    %v70 = vld [vmem:[%s0] sm:$0xff]
    %v71 = vld [vmem:[%s1] sm:$0x1]
    %72 = vset.pattern.permute.xlu0 0
    %73 = vperm.xlu0 %72, %v70
    %v74 = vpop.permute.xlu0 %73
    %v75 = vperm.slane %v71, 0
    %vm76 = vcmp.eq.s32.totalorder %v74, %v75
    %s77 = smul.u32 0, 8
    %s78 = sadd.s32 0, 1
    %s79 = smul.u32 %s78, 8
    %p80 = scmp.lt.s32.totalorder %s77, %s79
    %s81 = smul.u32 0, 8
    %s82 = sadd.s32 0, 1
    %s83 = smul.u32 %s82, 8
    %p84 = scmp.lt.s32.totalorder %s81, %s83
    %p85 = pnand %p80, %p84
    %p86 = pneg %p85
    // Predicated region
    $region26: #{tpu_custom_call.1} parent=1 // pred_check
      _
    $region27: #{tpu_custom_call.1} parent=1 // pred_check_branch
      %88 = sbr.rel (%p85) target = $region29
    $region28: #{tpu_custom_call.1} parent=1 // pred_region
      %v89 = vlaneseq
      %v90 = vshrl.u32 %v89, 7
      %v91 = vstv %s77
      %v92 = vadd.s32 %v91, %v90
      %v93 = vlaneseq
      %v94 = vand.u32 %v93, 127
      %v95 = vstv %s81
      %v96 = vadd.s32 %v95, %v94
      %vm97 = vcmp.eq.s32.totalorder %v92, %v96
      %v98 = vsel %vm97, 0.0, %v69
      %v99 = vld [vmem:[#allocation2] sm:$0xff]
      %v100 = vadd.f32 %v99, %v98
      %vm101 = vcmask 64512
      %102 = vst.msk [vmem:[#allocation2] sm:$0xff] %vm101, %v100
      %v103 = vld [vmem:[#allocation3] sm:$0xff]
      %v104 = vsel %vm76, %v98, 0.0
      %v105 = vadd.f32 %v103, %v104
      %106 = vst.msk [vmem:[#allocation3] sm:$0xff] %vm101, %v105
    $region29: #{tpu_custom_call.1} parent=1 // pred_fallthru
      _
    %p107 = pneg %p86
    // Predicated region
    $region30: #{tpu_custom_call.1} parent=1 // pred_check
      _
    $region31: #{tpu_custom_call.1} parent=1 // pred_check_branch
      %109 = sbr.rel (%p86) target = $region33
    $region32: #{tpu_custom_call.1} parent=1 // pred_region
      %v110 = vld [vmem:[#allocation2] sm:$0xff]
      %v111 = vadd.f32 %v110, %v69
      %vm112 = vcmask 64512
      %113 = vst.msk [vmem:[#allocation2] sm:$0xff] %vm112, %v111
      %v114 = vld [vmem:[#allocation3] sm:$0xff]
      %v115 = vsel %vm76, %v69, 0.0
      %v116 = vadd.f32 %v114, %v115
      %117 = vst.msk [vmem:[#allocation3] sm:$0xff] %vm112, %v116
    $region33: #{tpu_custom_call.1} parent=1 // pred_fallthru
      _
    // Predicated region
    $region34: #{tpu_custom_call.1} parent=1 // pred_check
      %p118 = pneg %p31
    $region35: #{tpu_custom_call.1} parent=1 // pred_check_branch
      %120 = sbr.rel (%p118) target = $region37
    $region36: #{tpu_custom_call.1} parent=1 // pred_region
      %v121 = vld [vmem:[#allocation2] sm:$0xff]
      %vm122 = vcmask 64512
      %v123 = vsel %vm122, %v121, 0.0
      %124 = vadd.xlane.f32.xlu0 %v123
      %v125 = vpop.xlane.xlu0 %124
      %v126 = vld [vmem:[#allocation3] sm:$0xff]
      %v127 = vsel %vm122, %v126, 0.0
      %128 = vadd.xlane.f32.xlu0 %v127
      %v129 = vpop.xlane.xlu0 %128
      %v130 = vlog2.pop %v129
      %v131 = vmul.f32 %v130, 0.6931472
      %v132 = vlog2.pop %v125
      %v133 = vmul.f32 %v132, 0.6931472
      %v134 = vsub.f32 %v131, %v133
      %vm135 = vcmask 7168
      %136 = vst.msk [vmem:[%s4] sm:$0xff] %vm135, %v134
    $region37: #{tpu_custom_call.1} parent=1 // pred_fallthru
      _
    // Predicated region
    $region38: #{tpu_custom_call.1} parent=1 // pred_check
      _
    $region39: #{tpu_custom_call.1} parent=1 // pred_check_branch
      %138 = sbr.rel (0) target = $region41
    $region40: #{tpu_custom_call.1} parent=1 // pred_region
      _
    $region41: #{tpu_custom_call.1} parent=1 // pred_fallthru
      _
    // Predicated region
    $region42: #{tpu_custom_call.1} parent=1 // pred_check
      _
    $region43: #{tpu_custom_call.1} parent=1 // pred_check_branch
      %140 = sbr.rel (0) target = $region45
    $region44: #{tpu_custom_call.1} parent=1 // pred_region
      _
    $region45: #{tpu_custom_call.1} parent=1 // pred_fallthru
      _
    %141 = vsyncpa [#allocation5], 1

</llo_original>
